<compile_context>
chip_gen: v6e
topology: v6e:2x2x1
jax: 0.10.0
libtpu: 0.0.40
codegen_flags: <defaults>
</compile_context>

<pallas_src>
import functools

import jax
import jax.numpy as jnp
from jax import lax
from jax.experimental import pallas as pl
from jax.experimental.pallas import tpu as pltpu

BN_EPS = 1e-5

_VMEM = pl.BlockSpec(memory_space=pltpu.MemorySpace.VMEM)


# ---------------------------------------------------------------------------
# Standalone Residual block kernel (matches the PyTorch module exactly:
# Linear -> BatchNorm1d(training stats) -> ReLU -> cat([out, input_], dim=1)).
# ---------------------------------------------------------------------------
def _residual_kernel(x_ref, w_ref, gamma_ref, beta_ref, out_ref):
    x = x_ref[...]                                            # (N, in_dim)
    # fc bias omitted: BN (training mode) subtracts the batch mean, which
    # cancels any per-feature constant exactly.
    h = jnp.dot(x, w_ref[...], preferred_element_type=jnp.float32)
    mean = jnp.mean(h, axis=0, keepdims=True)
    centered = h - mean
    var = jnp.mean(centered * centered, axis=0, keepdims=True)
    scale = gamma_ref[...] * lax.rsqrt(var + BN_EPS)          # folded BN affine
    shift = beta_ref[...] - mean * scale
    h = jnp.maximum(h * scale + shift, 0.0)                   # ReLU
    # Single offset-0 lane-dense store (no masked store at lane offset).
    out_ref[...] = jnp.concatenate(
        [h, x.astype(jnp.float32)], axis=1).astype(out_ref.dtype)


def residual_forward(x, w_t, gamma, beta):
    """x: (N, in); w_t: (in, out); gamma/beta: (1, out) -> (N, out + in)."""
    n, in_dim = x.shape
    out_dim = w_t.shape[1]
    return pl.pallas_call(
        _residual_kernel,
        out_shape=jax.ShapeDtypeStruct((n, out_dim + in_dim), jnp.float32),
        in_specs=[_VMEM] * 4,
        out_specs=_VMEM,
    )(x, w_t, gamma, beta)


# ---------------------------------------------------------------------------
# Fused generator kernel: all Residual blocks + final Linear in one call.
# ---------------------------------------------------------------------------
def _generator_kernel(*refs, gen_dims, data_dim, compute_dtype):
    """Ref layout (all VMEM, single resident block, no grid):

      refs[0]                 x                             (N, emb)
      refs[1 .. L]            per-residual full weight      (in_l, gen_dims[l])
      refs[L+1]               final full weight             (in_final, data_dim)
      refs[L+2]               packed vec = [g0,b0,g1,b1,...,final_bias]  (1, T)
      refs[-1]                out                           (N, data_dim)
    """
    n_layers = len(gen_dims)
    x_ref = refs[0]
    w_refs = refs[1:1 + n_layers + 1]
    vec_ref = refs[1 + n_layers + 1]
    out_ref = refs[-1]

    vec = vec_ref[...]                           # (1, total) f32
    act = x_ref[...].astype(compute_dtype)       # cast once at entry
    off = 0

    for l in range(n_layers):
        d = gen_dims[l]
        # One lane-aligned matmul per layer on the running concat (no pieces).
        h = jnp.dot(act, w_refs[l][...], preferred_element_type=jnp.float32)
        gamma = vec[:, off:off + d]
        beta = vec[:, off + d:off + 2 * d]
        off += 2 * d
        # BatchNorm1d, training mode (biased batch stats); fc bias omitted
        # since mean subtraction cancels it.  Affine folded into scale/shift.
        mean = jnp.mean(h, axis=0, keepdims=True)
        centered = h - mean
        var = jnp.mean(centered * centered, axis=0, keepdims=True)
        scale = gamma * lax.rsqrt(var + BN_EPS)
        shift = beta - mean * scale
        h = jnp.maximum(h * scale + shift, 0.0)  # ReLU
        # == torch.cat([out, input_], dim=1), kept in registers/VMEM values.
        act = jnp.concatenate([h.astype(compute_dtype), act], axis=1)

    # Final Linear (bias kept -- no BN after it).
    b = vec[:, off:off + data_dim]
    out = jnp.dot(act, w_refs[n_layers][...],
                  preferred_element_type=jnp.float32) + b
    out_ref[...] = out.astype(out_ref.dtype)


def generator_forward(params, x, *, compute_dtype=jnp.float32):
    """Single fused Pallas kernel for Generator.forward."""
    n = x.shape[0]
    gen_dims = params["gen_dims"]
    data_dim = params["data_dim"]

    if compute_dtype == jnp.bfloat16:
        weights = params["weights_bf16"]         # pre-cast at init (v5e/v6e/v7x)
    else:
        weights = params["weights_f32"]

    args = [x] + list(weights) + [params["vec"]]

    kernel = functools.partial(_generator_kernel, gen_dims=gen_dims,
                               data_dim=data_dim, compute_dtype=compute_dtype)
    return pl.pallas_call(
        kernel,
        out_shape=jax.ShapeDtypeStruct((n, data_dim), jnp.float32),
        in_specs=[_VMEM] * len(args),
        out_specs=_VMEM,
    )(*args)


# ---------------------------------------------------------------------------
# Parameters (kernel-friendly layout: (in, out) full weights per layer,
# pre-cast bf16 copies, one packed gamma/beta/bias vector) + pure-JAX ref.
# ---------------------------------------------------------------------------
def init_generator_params(key, embedding_dim, generator_dim, data_dim):
    params = {"gen_dims": tuple(generator_dim), "data_dim": data_dim,
              "residuals": []}
    weights = []
    vec_parts = []
    in_dim = embedding_dim
    for item in generator_dim:
        key, k_w, k_b = jax.random.split(key, 3)
        w = jax.random.normal(k_w, (in_dim, item), jnp.float32) * 0.1  # (in, out)
        b = jax.random.normal(k_b, (1, item), jnp.float32) * 0.1
        gamma = jnp.ones((1, item), jnp.float32)
        beta = jnp.zeros((1, item), jnp.float32)
        params["residuals"].append({
            "w_full": w,
            "b": b,                               # used only by the reference
            "gamma": gamma,
            "beta": beta,
        })
        weights.append(w)
        vec_parts.extend([gamma, beta])
        in_dim += item                            # cat([out, input_], 1)
    key, k_w, k_b = jax.random.split(key, 3)
    w = jax.random.normal(k_w, (in_dim, data_dim), jnp.float32) * 0.1
    final_b = jax.random.normal(k_b, (1, data_dim), jnp.float32) * 0.1
    params["final_w_full"] = w
    params["final_b"] = final_b
    weights.append(w)
    vec_parts.append(final_b)

    params["weights_f32"] = weights
    params["weights_bf16"] = [wi.astype(jnp.bfloat16) for wi in weights]
    params["vec"] = jnp.concatenate(vec_parts, axis=1)   # (1, 2*sum(gd)+data)
    return params


def generator_forward_ref(params, x):
    """Pure-JAX reference (keeps the fc bias -- BN training mode cancels it)."""
    for layer in params["residuals"]:
        h = x @ layer["w_full"] + layer["b"]
        mean = jnp.mean(h, axis=0, keepdims=True)
        var = jnp.mean((h - mean) ** 2, axis=0, keepdims=True)
        h = (h - mean) / jnp.sqrt(var + BN_EPS)
        h = h * layer["gamma"] + layer["beta"]
        h = jnp.maximum(h, 0.0)
        x = jnp.concatenate([h, x], axis=1)
    return x @ params["final_w_full"] + params["final_b"]


if __name__ == "__main__":
    embedding_dim = 32
    generator_dim = (32, 64)
    data_dim = 16
    batch = 8

    key = jax.random.PRNGKey(0)
    key, k_params, k_x = jax.random.split(key, 3)
    params = init_generator_params(k_params, embedding_dim, generator_dim,
                                   data_dim)
    x = jax.random.normal(k_x, (batch, embedding_dim), jnp.float32)

    # --- standalone Residual block (the spec module) ---
    layer0 = params["residuals"][0]
    res_out = jax.block_until_ready(
        residual_forward(x, layer0["w_full"], layer0["gamma"], layer0["beta"]))
    h = x @ layer0["w_full"] + layer0["b"]
    mean = jnp.mean(h, axis=0, keepdims=True)
    var = jnp.mean((h - mean) ** 2, axis=0, keepdims=True)
    h = jnp.maximum((h - mean) / jnp.sqrt(var + BN_EPS) * layer0["gamma"]
                    + layer0["beta"], 0.0)
    res_ref = jnp.concatenate([h, x], axis=1)
    assert res_out.shape == (batch, generator_dim[0] + embedding_dim)
    assert jnp.allclose(res_out, res_ref, atol=1e-4, rtol=1e-4), (
        float(jnp.max(jnp.abs(res_out - res_ref))))

    # --- fused generator (single pallas_call), f32 math ---
    out = jax.block_until_ready(generator_forward(params, x))
    ref = generator_forward_ref(params, x)
    assert out.shape == (batch, data_dim), out.shape
    assert jnp.allclose(out, ref, atol=1e-4, rtol=1e-4), (
        float(jnp.max(jnp.abs(out - ref))))

    # --- bf16 MXU-input path (valid on v5e/v6e/v7x), f32 accumulation ---
    out_bf16 = jax.block_until_ready(
        generator_forward(params, x, compute_dtype=jnp.bfloat16))
    assert jnp.allclose(out_bf16, ref, atol=2e-1, rtol=0.0), (
        float(jnp.max(jnp.abs(out_bf16 - ref))))

    print("KERNEL_OK")
</pallas_src>

<mosaic_0001>
module attributes {stable_mosaic.version = 11 : i64} {
  func.func @_residual_kernel(%arg0: memref<8x32xf32, #tpu.memory_space<vmem>>, %arg1: memref<32x32xf32, #tpu.memory_space<vmem>>, %arg2: memref<1x32xf32, #tpu.memory_space<vmem>>, %arg3: memref<1x32xf32, #tpu.memory_space<vmem>>, %arg4: memref<8x64xf32, #tpu.memory_space<vmem>>) attributes {dimension_semantics = [], scalar_prefetch = 0 : i64, scratch_operands = 0 : i64, tpu.core_type = #tpu.core_type<tc>} {
    %c0 = arith.constant 0 : index
    %c0_0 = arith.constant 0 : index
    %0 = vector.load %arg0[%c0, %c0_0] : memref<8x32xf32, #tpu.memory_space<vmem>>, vector<8x32xf32>
    %c0_1 = arith.constant 0 : index
    %c0_2 = arith.constant 0 : index
    %1 = vector.load %arg1[%c0_1, %c0_2] : memref<32x32xf32, #tpu.memory_space<vmem>>, vector<32x32xf32>
    %cst = arith.constant dense<0.000000e+00> : vector<8x32xf32>
    %2 = tpu.matmul %0, %1, %cst {dimension_numbers = #tpu.dot_dimension_numbers<[1], [0], [0], [1], [0, 0, 1, 1], [], []>} : vector<8x32xf32>, vector<32x32xf32>, vector<8x32xf32> -> vector<8x32xf32>
    %cst_3 = arith.constant dense<0.000000e+00> : vector<32xf32>
    %3 = vector.multi_reduction <add>, %2, %cst_3 [0] : vector<8x32xf32> to vector<32xf32>
    %4 = vector.shape_cast %3 : vector<32xf32> to vector<1x32xf32>
    %cst_4 = arith.constant 8.000000e+00 : f32
    %5 = vector.broadcast %cst_4 : f32 to vector<1x32xf32>
    %6 = arith.divf %4, %5 : vector<1x32xf32>
    %7 = vector.broadcast %6 : vector<1x32xf32> to vector<8x32xf32>
    %8 = arith.subf %2, %7 : vector<8x32xf32>
    %9 = arith.mulf %8, %8 : vector<8x32xf32>
    %cst_5 = arith.constant dense<0.000000e+00> : vector<32xf32>
    %10 = vector.multi_reduction <add>, %9, %cst_5 [0] : vector<8x32xf32> to vector<32xf32>
    %11 = vector.shape_cast %10 : vector<32xf32> to vector<1x32xf32>
    %cst_6 = arith.constant 8.000000e+00 : f32
    %12 = vector.broadcast %cst_6 : f32 to vector<1x32xf32>
    %13 = arith.divf %11, %12 : vector<1x32xf32>
    %c0_7 = arith.constant 0 : index
    %c0_8 = arith.constant 0 : index
    %14 = vector.load %arg2[%c0_7, %c0_8] : memref<1x32xf32, #tpu.memory_space<vmem>>, vector<1x32xf32>
    %cst_9 = arith.constant 9.99999974E-6 : f32
    %15 = vector.broadcast %cst_9 : f32 to vector<1x32xf32>
    %16 = arith.addf %13, %15 : vector<1x32xf32>
    %17 = math.rsqrt %16 : vector<1x32xf32>
    %18 = arith.mulf %14, %17 : vector<1x32xf32>
    %c0_10 = arith.constant 0 : index
    %c0_11 = arith.constant 0 : index
    %19 = vector.load %arg3[%c0_10, %c0_11] : memref<1x32xf32, #tpu.memory_space<vmem>>, vector<1x32xf32>
    %20 = arith.mulf %6, %18 : vector<1x32xf32>
    %21 = arith.subf %19, %20 : vector<1x32xf32>
    %22 = vector.broadcast %18 : vector<1x32xf32> to vector<8x32xf32>
    %23 = arith.mulf %2, %22 : vector<8x32xf32>
    %24 = vector.broadcast %21 : vector<1x32xf32> to vector<8x32xf32>
    %25 = arith.addf %23, %24 : vector<8x32xf32>
    %cst_12 = arith.constant 0.000000e+00 : f32
    %26 = vector.broadcast %cst_12 : f32 to vector<8x32xf32>
    %27 = arith.maximumf %25, %26 : vector<8x32xf32>
    %28 = tpu.concatenate %27, %0 in 1 : vector<8x32xf32>, vector<8x32xf32> -> vector<8x64xf32>
    %c0_13 = arith.constant 0 : index
    %c0_14 = arith.constant 0 : index
    %29 = vector.load %arg4[%c0_13, %c0_14] : memref<8x64xf32, #tpu.memory_space<vmem>>, vector<8x64xf32>
    tpu.vector_store %arg4[%c0_13, %c0_14], %28 {strides = array<i32>} : memref<8x64xf32, #tpu.memory_space<vmem>>, vector<8x64xf32>,
    return
  }
}

</mosaic_0001>

<llo_original>
// kernel: tpu_custom_call.1
$region0: #{tpu_custom_call.1}
  #allocation0 [shape = 'u32[]', space=smem, size = 0x4, offset = 0x4, fixed_abs, tag = 'smem constant byte address 0x4 - core index']
  #allocation1 [shape = 'u32[144,128]{1,0:T(1,128)}', space=vmem, size = 0x12000, scoped, tag = 'internal scratch']
  %s0 = inlined_call_operand.hbm [shape: f32[8,32], index: 0, kind: input, shape index: {}]
  %s1 = inlined_call_operand.hbm [shape: f32[32,32], index: 1, kind: input, shape index: {}]
  %s2 = inlined_call_operand.vmem [shape: f32[1,32], index: 2, kind: input, shape index: {}]
  %s3 = inlined_call_operand.vmem [shape: f32[1,32], index: 3, kind: input, shape index: {}]
  %s4 = inlined_call_operand.hbm [shape: f32[8,64], index: 4, kind: output, shape index: {}]
  %s5 = sld [smem:[#allocation0]]
  $region34: #{tpu_custom_call.1} parent=0
    _
  %s7 = ssub.s32 1, %s5
  %s8 = scalar_select 0, %s7, %s5
  $region1: #{tpu_custom_call.1} parent=0
    #allocation2 [shape = 'u8[4096]{0}', space=vmem, size = 0x1000, scoped, tag = 'input window, operand 0, single buffered']
    #allocation3 [shape = 's32[1]{0}', space=sflag, size = 0x4, scoped, tag = 'scoped memory for tpu_custom_call.1']
    #allocation4 [shape = 's32[1]{0}', space=sflag, size = 0x4, scoped, tag = 'scoped memory for tpu_custom_call.1']
    #allocation5 [shape = 'u8[16384]{0}', space=vmem, size = 0x4000, scoped, tag = 'input window, operand 1, single buffered']
    #allocation6 [shape = 's32[1]{0}', space=sflag, size = 0x4, scoped, tag = 'scoped memory for tpu_custom_call.1']
    #allocation7 [shape = 'u8[4096]{0}', space=vmem, size = 0x1000, scoped, tag = 'output window, operand 0, single buffered']
    %9 = vsyncpa [#allocation3], 0
    %10 = vsyncpa [#allocation6], 0
    %11 = vsyncpa [#allocation4], 0
    // Predicated region
    $region2: #{tpu_custom_call.1} parent=1 // pred_check
      _
    $region3: #{tpu_custom_call.1} parent=1 // pred_check_branch
      %13 = sbr.rel (0) target = $region5
    $region4: #{tpu_custom_call.1} parent=1 // pred_region
      %s15 = ssub.s32 128, 128
      %16 = vsyncadd [#allocation3], %s15
      %s18 = sshll.u32 [#allocation2], 4
      %s19 = int_to_ptr.vmem [resolvable:$true] %s18
      %21 = dma.hbm_to_vmem [thread:$0]  %s0, 128, %s19, [#allocation3]
    $region5: #{tpu_custom_call.1} parent=1 // pred_fallthru
      _
    // Predicated region
    $region6: #{tpu_custom_call.1} parent=1 // pred_check
      _
    $region7: #{tpu_custom_call.1} parent=1 // pred_check_branch
      %23 = sbr.rel (0) target = $region9
    $region8: #{tpu_custom_call.1} parent=1 // pred_region
      %s25 = ssub.s32 512, 512
      %26 = vsyncadd [#allocation6], %s25
      %s27 = sshll.u32 [#allocation5], 4
      %s28 = int_to_ptr.vmem [resolvable:$true] %s27
      %33 = dma.hbm_to_vmem [thread:$0]  %s1, 512, %s28, [#allocation6], 128, 128, 8
    $region9: #{tpu_custom_call.1} parent=1 // pred_fallthru
      _
    // Predicated region
    $region10: #{tpu_custom_call.1} parent=1 // pred_check
      _
    $region11: #{tpu_custom_call.1} parent=1 // pred_check_branch
      %35 = sbr.rel (0) target = $region13
    $region12: #{tpu_custom_call.1} parent=1 // pred_region
      _
    $region13: #{tpu_custom_call.1} parent=1 // pred_fallthru
      _
    // Predicated region
    $region14: #{tpu_custom_call.1} parent=1 // pred_check
      _
    $region15: #{tpu_custom_call.1} parent=1 // pred_check_branch
      %37 = sbr.rel (0) target = $region17
    $region16: #{tpu_custom_call.1} parent=1 // pred_region
      _
    $region17: #{tpu_custom_call.1} parent=1 // pred_fallthru
      _
    // Predicated region
    $region18: #{tpu_custom_call.1} parent=1 // pred_check
      _
    $region19: #{tpu_custom_call.1} parent=1 // pred_check_branch
      %39 = sbr.rel (0) target = $region21
    $region20: #{tpu_custom_call.1} parent=1 // pred_region
      %40 = dma.done [#allocation3], 128
    $region21: #{tpu_custom_call.1} parent=1 // pred_fallthru
      _
    // Predicated region
    $region22: #{tpu_custom_call.1} parent=1 // pred_check
      _
    $region23: #{tpu_custom_call.1} parent=1 // pred_check_branch
      %42 = sbr.rel (0) target = $region25
    $region24: #{tpu_custom_call.1} parent=1 // pred_region
      %43 = dma.done [#allocation6], 512
    $region25: #{tpu_custom_call.1} parent=1 // pred_fallthru
      _
    %v44 = vld [vmem:[#allocation2] sm:$0xff]
    %v45 = vld [vmem:[#allocation5] sm:$0xff]
    %v46 = vld [vmem:[#allocation5 + $0x8] sm:$0xff]
    %v47 = vld [vmem:[#allocation5 + $0x10] sm:$0xff]
    %v48 = vld [vmem:[#allocation5 + $0x18] sm:$0xff]
    %vm49 = vcmask 261120
    %v51 = vsel %vm49, %v44, 0
    %53 = vmatprep.subr.mxu0 0.0
    %54 = vmatpush1.msra.mxu0 0.0
    %55 = vmatprep.subr.mxu0 0.0
    %56 = vmatpush1.msra.mxu0 0.0
    %57 = vmatprep.subr.mxu0 0.0
    %58 = vmatpush1.msra.mxu0 0.0
    %59 = vmatprep.subr.mxu0 0.0
    %60 = vmatpush1.msra.mxu0 0.0
    %61 = vmatprep.subr.mxu0 0.0
    %62 = vmatpush1.msra.mxu0 0.0
    %63 = vmatprep.subr.mxu0 0.0
    %64 = vmatpush1.msra.mxu0 0.0
    %65 = vmatprep.subr.mxu0 0.0
    %66 = vmatpush1.msra.mxu0 0.0
    %67 = vmatprep.subr.mxu0 0.0
    %68 = vmatpush1.msra.mxu0 0.0
    %69 = vmatprep.subr.mxu0 0.0
    %70 = vmatpush1.msra.mxu0 0.0
    %71 = vmatprep.subr.mxu0 0.0
    %72 = vmatpush1.msra.mxu0 0.0
    %73 = vmatprep.subr.mxu0 0.0
    %74 = vmatpush1.msra.mxu0 0.0
    %75 = vmatprep.subr.mxu0 0.0
    %76 = vmatpush1.msra.mxu0 0.0
    %77 = vmatprep.subr.mxu0 0.0
    %78 = vmatpush1.msra.mxu0 %v48
    %79 = vmatprep.subr.mxu0 0.0
    %80 = vmatpush1.msra.mxu0 %v47
    %81 = vmatprep.subr.mxu0 0.0
    %82 = vmatpush1.msra.mxu0 %v46
    %83 = vmatprep.subr.mxu0 0.0
    %84 = vmatpush1.msra.mxu0 %v45
    %85 = vmatprep.subr.mxu0 0.0
    %86 = vmatpush2.msra.mxu0 0.0
    %87 = vmatprep.subr.mxu0 0.0
    %88 = vmatpush2.msra.mxu0 0.0
    %89 = vmatprep.subr.mxu0 0.0
    %90 = vmatpush2.msra.mxu0 0.0
    %91 = vmatprep.subr.mxu0 0.0
    %92 = vmatpush2.msra.mxu0 0.0
    %93 = vmatprep.subr.mxu0 0.0
    %94 = vmatpush2.msra.mxu0 0.0
    %95 = vmatprep.subr.mxu0 0.0
    %96 = vmatpush2.msra.mxu0 0.0
    %97 = vmatprep.subr.mxu0 0.0
    %98 = vmatpush2.msra.mxu0 0.0
    %99 = vmatprep.subr.mxu0 0.0
    %100 = vmatpush2.msra.mxu0 0.0
    %101 = vmatprep.subr.mxu0 0.0
    %102 = vmatpush2.msra.mxu0 0.0
    %103 = vmatprep.subr.mxu0 0.0
    %104 = vmatpush2.msra.mxu0 0.0
    %105 = vmatprep.subr.mxu0 0.0
    %106 = vmatpush2.msra.mxu0 0.0
    %107 = vmatprep.subr.mxu0 0.0
    %108 = vmatpush2.msra.mxu0 0.0
    %109 = vmatprep.subr.mxu0 0.0
    %110 = vmatpush2.msra.mxu0 0.0
    %111 = vmatprep.subr.mxu0 0.0
    %112 = vmatpush2.msra.mxu0 0.0
    %113 = vmatprep.subr.mxu0 0.0
    %114 = vmatpush2.msra.mxu0 0.0
    %115 = vmatprep.subr.mxu0 0.0
    %116 = vmatpush2.msra.mxu0 0.0
    %117 = vmatprep.mubr.f32.mxu0 0.0
    %118 = vmatmul.mubr.f32.gmra.mxu0 %v51
    %v119 = vpop.f32.mrf.mxu0
    %v120 = vadd.f32 0.0, %v119
    %v121 = vpop.f32.mrf.mxu0
    %122 = vdwg.mxu0
    %v123 = vsel %vm49, %v120, 0.0
    %v124 = vrot.slane %v123, 4
    %v125 = vadd.f32 %v123, %v124
    %v126 = vrot.slane %v125, 2
    %v127 = vadd.f32 %v125, %v126
    %v128 = vrot.slane %v127, 1
    %v129 = vadd.f32 %v127, %v128
    %v130 = vrcp.pop 8.0
    %v131 = vmul.f32 %v129, %v130
    %v132 = vsub.f32 %v120, %v131
    %v133 = vmul.f32 %v132, %v132
    %v134 = vsel %vm49, %v133, 0.0
    %v135 = vrot.slane %v134, 4
    %v136 = vadd.f32 %v134, %v135
    %v137 = vrot.slane %v136, 2
    %v138 = vadd.f32 %v136, %v137
    %v139 = vrot.slane %v138, 1
    %v140 = vadd.f32 %v138, %v139
    %v141 = vmul.f32 %v140, %v130
    %v142 = vld [vmem:[%s2] sm:$0x1]
    %v143 = vadd.f32 %v141, 1e-05
    %v144 = vrsqrt.pop %v143
    %v145 = vmul.f32 %v142, %v144
    %v146 = vld [vmem:[%s3] sm:$0x1]
    %v147 = vmul.f32 %v131, %v145
    %v148 = vsub.f32 %v146, %v147
    %v150 = vlaneseq
    %v151 = vshrl.u32 %v150, 7
    %v152 = vsub.s32 0, %v151
    %v153 = vrot.slane %v145, %v152
    %v155 = vmul.f32 %v120, %v153
    %v157 = vlaneseq
    %v158 = vshrl.u32 %v157, 7
    %v159 = vsub.s32 0, %v158
    %v160 = vrot.slane %v148, %v159
    %v162 = vadd.f32 %v155, %v160
    %v163 = vmax.f32 %v162, 0.0
    %164 = vrot.lane.b32.xlu0 %v44, 32
    %v165 = vpop.permute.xlu0 %164
    %v167 = vsel %vm49, %v163, %v165
    %vm168 = vcmask 523264
    %169 = vst.msk [vmem:[#allocation7] sm:$0xff] %vm168, %v167
    // Predicated region
    $region26: #{tpu_custom_call.1} parent=1 // pred_check
      _
    $region27: #{tpu_custom_call.1} parent=1 // pred_check_branch
      %171 = sbr.rel (0) target = $region29
    $region28: #{tpu_custom_call.1} parent=1 // pred_region
      %s173 = ssub.s32 128, 128
      %174 = vsyncadd [#allocation4], %s173
      %s176 = sshll.u32 [#allocation7], 4
      %s177 = int_to_ptr.vmem [resolvable:$true] %s176
      %179 = dma.vmem_to_hbm [thread:$0]  %s177, 128, %s4, [#allocation4]
    $region29: #{tpu_custom_call.1} parent=1 // pred_fallthru
      _
    // Predicated region
    $region30: #{tpu_custom_call.1} parent=1 // pred_check
      _
    $region31: #{tpu_custom_call.1} parent=1 // pred_check_branch
      %181 = sbr.rel (0) target = $region33
    $region32: #{tpu_custom_call.1} parent=1 // pred_region
      %182 = dma.done [#allocation4], 128
    $region33: #{tpu_custom_call.1} parent=1 // pred_fallthru
      _
    %183 = vsyncpa [#allocation3], 1
    %184 = vsyncpa [#allocation6], 1
    %185 = vsyncpa [#allocation4], 1

</llo_original>
